<compile_context>
chip_gen: v7x
topology: tpu7x:2x2x1
jax: 0.10.0
libtpu: 0.0.40
codegen_flags: <defaults>
</compile_context>

<pallas_src>
import functools

import jax
import jax.numpy as jnp
from jax import lax
from jax.experimental import pallas as pl
from jax.experimental.pallas import tpu as pltpu


def _round_up(x, m):
    return (x + m - 1) // m * m


def _mlp_residual_kernel(num_blocks, eps, cast_bf16,
                         x_ref, w1_ref, b1_ref,
                         wr_ref, br_ref, g_ref, bt_ref,
                         wo_ref, o_ref, acc_ref):
    """One (batch-tile, k-tile) grid step.

    x_ref : (TB, TK)           input-projection K-slice of the flattened image
    w1_ref: (TK, H)            matching K-slice of the input projection weight
    b1_ref: (1, H)             input projection bias
    wr_ref: (L, H, H)          residual-block linear weights (resident)
    br_ref/g_ref/bt_ref: (L, 1, H)   residual bias / LN gamma / LN beta
    wo_ref: (H, Cpad)          zero-padded, lane-dense output head (no bias)
    o_ref : (TB, Cpad)         logits tile
    acc_ref: (TB, H) f32 VMEM scratch, persists across the K axis
    """
    k = pl.program_id(1)
    nk = pl.num_programs(1)

    @pl.when(k == 0)
    def _():
        acc_ref[...] = jnp.zeros_like(acc_ref)

    # Input projection, K-tiled: acc += x_k @ w1_k  (MXU, f32 accumulation).
    x = x_ref[...]
    w1 = w1_ref[...]
    if cast_bf16:
        x = x.astype(jnp.bfloat16)
        w1 = w1.astype(jnp.bfloat16)
    acc_ref[...] += jnp.dot(x, w1, preferred_element_type=jnp.float32)

    # On the last K step: bias + ReLU, residual blocks, output head.
    @pl.when(k == nk - 1)
    def _():
        h = jnp.maximum(acc_ref[...] + b1_ref[...], 0.0)

        for i in range(num_blocks):  # unrolled at trace time
            hi = h
            wi = wr_ref[i]
            if cast_bf16:
                hi = hi.astype(jnp.bfloat16)
                wi = wi.astype(jnp.bfloat16)
            y = jnp.dot(hi, wi, preferred_element_type=jnp.float32) + br_ref[i]
            # LayerNorm (biased variance, eps inside rsqrt) in f32.
            mean = jnp.mean(y, axis=-1, keepdims=True)
            var = jnp.mean(jnp.square(y - mean), axis=-1, keepdims=True)
            y = (y - mean) * lax.rsqrt(var + eps)
            y = y * g_ref[i] + bt_ref[i]
            y = jnp.maximum(y, 0.0)
            h = jnp.maximum(h + y, 0.0)

        ho = h
        wo = wo_ref[...]
        if cast_bf16:
            ho = ho.astype(jnp.bfloat16)
            wo = wo.astype(jnp.bfloat16)
        o_ref[...] = jnp.dot(ho, wo,
                             preferred_element_type=jnp.float32).astype(o_ref.dtype)


def mlp_classifier_deep_residual(x, params, *, use_bf16_matmul=False):
    """x: (b, 3, H, W) float32 -> (b, num_classes) float32 logits."""
    b = x.shape[0]
    x_flat = x.reshape(b, -1)          # identical to nn.Flatten on NCHW
    d = x_flat.shape[1]

    w1, b1, wr, br, gamma, beta, wo = params
    num_blocks = wr.shape[0]
    hidden = w1.shape[1]
    num_classes = wo.shape[1]

    # ---- batch tiling (sublane-aligned, multiple of 8; 128 for big batches)
    tile_b = 128 if b >= 128 else _round_up(b, 8)
    b_pad = _round_up(b, tile_b)

    # ---- K (feature) tiling: pad D to a multiple of 128, pick a lane-aligned tile
    d_pad = _round_up(d, 128)
    tile_k = 128
    for cand in (512, 256, 128):
        if d_pad % cand == 0:
            tile_k = cand
            break

    # ---- lane-dense output head: pad num_classes to 128 lanes with zero cols
    c_pad = _round_up(num_classes, 128)

    if b_pad != b or d_pad != d:
        x_flat = jnp.pad(x_flat, ((0, b_pad - b), (0, d_pad - d)))
    if d_pad != d:
        w1 = jnp.pad(w1, ((0, d_pad - d), (0, 0)))   # zero rows: no effect on result
    wo_p = jnp.pad(wo, ((0, 0), (0, c_pad - num_classes))) if c_pad != num_classes else wo

    grid = (b_pad // tile_b, d_pad // tile_k)

    # ---- VMEM budget: streamed tiles (double-buffered) + resident weights + scratch
    f32 = 4
    stream_bytes = 2 * f32 * (tile_b * tile_k + tile_k * hidden + tile_b * c_pad)
    resident_bytes = 2 * f32 * (hidden
                                + num_blocks * hidden * hidden
                                + 3 * num_blocks * hidden
                                + hidden * c_pad)
    scratch_bytes = f32 * tile_b * hidden
    vmem_limit = int(min(max(2 * (stream_bytes + resident_bytes + scratch_bytes),
                             8 << 20), 64 << 20))

    kernel = functools.partial(_mlp_residual_kernel, num_blocks, 1e-5,
                               bool(use_bf16_matmul))

    out_pad = pl.pallas_call(
        kernel,
        out_shape=jax.ShapeDtypeStruct((b_pad, c_pad), jnp.float32),
        grid=grid,
        in_specs=[
            # activations: stream per (batch, k) tile
            pl.BlockSpec((tile_b, tile_k), lambda i, k: (i, k)),
            # input-projection weight: stream its K slice, shared across batch tiles
            pl.BlockSpec((tile_k, hidden), lambda i, k: (k, 0)),
            # resident parameters: constant block index -> stay in VMEM
            pl.BlockSpec((1, hidden), lambda i, k: (0, 0)),
            pl.BlockSpec((num_blocks, hidden, hidden), lambda i, k: (0, 0, 0)),
            pl.BlockSpec((num_blocks, 1, hidden), lambda i, k: (0, 0, 0)),
            pl.BlockSpec((num_blocks, 1, hidden), lambda i, k: (0, 0, 0)),
            pl.BlockSpec((num_blocks, 1, hidden), lambda i, k: (0, 0, 0)),
            pl.BlockSpec((hidden, c_pad), lambda i, k: (0, 0)),
        ],
        out_specs=pl.BlockSpec((tile_b, c_pad), lambda i, k: (i, 0)),
        scratch_shapes=[pltpu.VMEM((tile_b, hidden), jnp.float32)],
        compiler_params=pltpu.CompilerParams(
            dimension_semantics=("parallel", "arbitrary"),
            vmem_limit_bytes=vmem_limit),
    )(x_flat, w1, b1, wr, br, gamma, beta, wo_p)

    return out_pad[:b, :num_classes]


def init_params(key, in_dim, hidden_dim, num_classes, num_blocks):
    """Deterministic synthetic parameters (PyTorch-like uniform init).

    Biases / LayerNorm params are stored lane-major 2-D: b1 (1,H), br/gamma/beta (L,1,H).
    """
    ks = jax.random.split(key, 3 + 2 * num_blocks)

    def lin(k, fan_in, shape):
        bound = 1.0 / float(fan_in) ** 0.5
        return jax.random.uniform(k, shape, jnp.float32, -bound, bound)

    w1 = lin(ks[0], in_dim, (in_dim, hidden_dim))
    b1 = lin(ks[1], in_dim, (1, hidden_dim))

    wr = jnp.stack([lin(ks[2 + i], hidden_dim, (hidden_dim, hidden_dim))
                    for i in range(num_blocks)])
    br = jnp.stack([lin(ks[2 + num_blocks + i], hidden_dim, (1, hidden_dim))
                    for i in range(num_blocks)])
    gamma = jnp.ones((num_blocks, 1, hidden_dim), jnp.float32)   # LayerNorm weight
    beta = jnp.zeros((num_blocks, 1, hidden_dim), jnp.float32)   # LayerNorm bias

    wo = lin(ks[2 + 2 * num_blocks], hidden_dim, (hidden_dim, num_classes))
    return (w1, b1, wr, br, gamma, beta, wo)


def _reference_forward(x, params, eps=1e-5):
    """Pure-JAX reference matching the PyTorch module."""
    w1, b1, wr, br, gamma, beta, wo = params
    h = x.reshape(x.shape[0], -1) @ w1 + b1
    h = jnp.maximum(h, 0.0)
    for i in range(wr.shape[0]):
        y = h @ wr[i] + br[i]
        mean = jnp.mean(y, axis=-1, keepdims=True)
        var = jnp.mean(jnp.square(y - mean), axis=-1, keepdims=True)
        y = (y - mean) * lax.rsqrt(var + eps)
        y = y * gamma[i] + beta[i]
        y = jnp.maximum(y, 0.0)
        h = jnp.maximum(h + y, 0.0)
    return h @ wo


if __name__ == "__main__":
    # Small shapes consistent with the module: (b, 3, H, W), hidden_dim=128,
    # num_classes=6, layer_size=[512,512,512] -> 3 residual blocks.
    B, C, H, W = 8, 3, 16, 16
    HIDDEN = 128
    NUM_CLASSES = 6
    NUM_BLOCKS = 3

    key = jax.random.PRNGKey(0)
    kx, kp = jax.random.split(key)
    x = jax.random.normal(kx, (B, C, H, W), jnp.float32)
    params = init_params(kp, C * H * W, HIDDEN, NUM_CLASSES, NUM_BLOCKS)

    logits = mlp_classifier_deep_residual(x, params)
    jax.block_until_ready(logits)
    assert logits.shape == (B, NUM_CLASSES)

    ref = _reference_forward(x, params)
    max_err = float(jnp.max(jnp.abs(logits - ref)))
    assert max_err < 2e-3, f"mismatch vs reference: {max_err}"

    print("KERNEL_OK")
</pallas_src>

<mosaic_0001>
module attributes {stable_mosaic.version = 11 : i64} {
  func.func @_mlp_residual_kernel(%arg0: i32, %arg1: i32, %arg2: memref<8x256xf32, #tpu.memory_space<vmem>>, %arg3: memref<256x128xf32, #tpu.memory_space<vmem>>, %arg4: memref<1x128xf32, #tpu.memory_space<vmem>>, %arg5: memref<3x128x128xf32, #tpu.memory_space<vmem>>, %arg6: memref<3x1x128xf32, #tpu.memory_space<vmem>>, %arg7: memref<3x1x128xf32, #tpu.memory_space<vmem>>, %arg8: memref<3x1x128xf32, #tpu.memory_space<vmem>>, %arg9: memref<128x128xf32, #tpu.memory_space<vmem>>, %arg10: memref<8x128xf32, #tpu.memory_space<vmem>>, %arg11: memref<8x128xf32, #tpu.memory_space<vmem>>) attributes {dimension_semantics = [#tpu.dimension_semantics<parallel>, #tpu.dimension_semantics<arbitrary>], iteration_bounds = array<i64: 1, 3>, scalar_prefetch = 0 : i64, scratch_operands = 1 : i64, tpu.core_type = #tpu.core_type<tc>, window_params = [{transform_indices = @transform_0, window_bounds = array<i64: 8, 256>}, {transform_indices = @transform_1, window_bounds = array<i64: 256, 128>}, {pipeline_mode = #tpu.pipeline_mode<synchronous>, transform_indices = @transform_2, window_bounds = array<i64: 1, 128>}, {pipeline_mode = #tpu.pipeline_mode<synchronous>, transform_indices = @transform_3, window_bounds = array<i64: 3, 128, 128>}, {pipeline_mode = #tpu.pipeline_mode<synchronous>, transform_indices = @transform_4, window_bounds = array<i64: 3, 1, 128>}, {pipeline_mode = #tpu.pipeline_mode<synchronous>, transform_indices = @transform_5, window_bounds = array<i64: 3, 1, 128>}, {pipeline_mode = #tpu.pipeline_mode<synchronous>, transform_indices = @transform_6, window_bounds = array<i64: 3, 1, 128>}, {pipeline_mode = #tpu.pipeline_mode<synchronous>, transform_indices = @transform_7, window_bounds = array<i64: 128, 128>}, {transform_indices = @transform_8, window_bounds = array<i64: 8, 128>}]} {
    %c0_i32 = arith.constant 0 : i32
    %0 = arith.cmpi eq, %arg1, %c0_i32 : i32
    %1 = arith.extui %0 : i1 to i32
    %c0_i32_0 = arith.constant 0 : i32
    %2 = arith.cmpi ne, %1, %c0_i32_0 : i32
    scf.if %2 {
      %cst_9 = arith.constant 0.000000e+00 : f32
      %12 = vector.broadcast %cst_9 : f32 to vector<8x128xf32>
      %c0_10 = arith.constant 0 : index
      %c0_11 = arith.constant 0 : index
      %13 = vector.load %arg11[%c0_10, %c0_11] : memref<8x128xf32, #tpu.memory_space<vmem>>, vector<8x128xf32>
      tpu.vector_store %arg11[%c0_10, %c0_11], %12 {strides = array<i32>} : memref<8x128xf32, #tpu.memory_space<vmem>>, vector<8x128xf32>,
    } else {
    }
    %c0 = arith.constant 0 : index
    %c0_1 = arith.constant 0 : index
    %3 = vector.load %arg2[%c0, %c0_1] : memref<8x256xf32, #tpu.memory_space<vmem>>, vector<8x256xf32>
    %c0_2 = arith.constant 0 : index
    %c0_3 = arith.constant 0 : index
    %4 = vector.load %arg3[%c0_2, %c0_3] : memref<256x128xf32, #tpu.memory_space<vmem>>, vector<256x128xf32>
    %c0_4 = arith.constant 0 : index
    %c0_5 = arith.constant 0 : index
    %5 = vector.load %arg11[%c0_4, %c0_5] : memref<8x128xf32, #tpu.memory_space<vmem>>, vector<8x128xf32>
    %cst = arith.constant dense<0.000000e+00> : vector<8x128xf32>
    %6 = tpu.matmul %3, %4, %cst {dimension_numbers = #tpu.dot_dimension_numbers<[1], [0], [0], [1], [0, 0, 1, 1], [], []>} : vector<8x256xf32>, vector<256x128xf32>, vector<8x128xf32> -> vector<8x128xf32>
    %7 = arith.addf %5, %6 : vector<8x128xf32>
    %c0_6 = arith.constant 0 : index
    %c0_7 = arith.constant 0 : index
    %8 = vector.load %arg11[%c0_6, %c0_7] : memref<8x128xf32, #tpu.memory_space<vmem>>, vector<8x128xf32>
    tpu.vector_store %arg11[%c0_6, %c0_7], %7 {strides = array<i32>} : memref<8x128xf32, #tpu.memory_space<vmem>>, vector<8x128xf32>,
    %c2_i32 = arith.constant 2 : i32
    %9 = arith.cmpi eq, %arg1, %c2_i32 : i32
    %10 = arith.extui %9 : i1 to i32
    %c0_i32_8 = arith.constant 0 : i32
    %11 = arith.cmpi ne, %10, %c0_i32_8 : i32
    scf.if %11 {
      %c0_9 = arith.constant 0 : index
      %c0_10 = arith.constant 0 : index
      %12 = vector.load %arg11[%c0_9, %c0_10] : memref<8x128xf32, #tpu.memory_space<vmem>>, vector<8x128xf32>
      %c0_11 = arith.constant 0 : index
      %c0_12 = arith.constant 0 : index
      %13 = vector.load %arg4[%c0_11, %c0_12] : memref<1x128xf32, #tpu.memory_space<vmem>>, vector<1x128xf32>
      %14 = vector.broadcast %13 : vector<1x128xf32> to vector<8x128xf32>
      %15 = arith.addf %12, %14 : vector<8x128xf32>
      %cst_13 = arith.constant 0.000000e+00 : f32
      %16 = vector.broadcast %cst_13 : f32 to vector<8x128xf32>
      %17 = arith.maximumf %15, %16 : vector<8x128xf32>
      %c0_14 = arith.constant 0 : index
      %c0_15 = arith.constant 0 : index
      %c0_16 = arith.constant 0 : index
      %18 = vector.load %arg5[%c0_14, %c0_15, %c0_16] : memref<3x128x128xf32, #tpu.memory_space<vmem>>, vector<1x128x128xf32>
      %19 = vector.shape_cast %18 : vector<1x128x128xf32> to vector<128x128xf32>
      %cst_17 = arith.constant dense<0.000000e+00> : vector<8x128xf32>
      %20 = tpu.matmul %17, %19, %cst_17 {dimension_numbers = #tpu.dot_dimension_numbers<[1], [0], [0], [1], [0, 0, 1, 1], [], []>} : vector<8x128xf32>, vector<128x128xf32>, vector<8x128xf32> -> vector<8x128xf32>
      %c0_18 = arith.constant 0 : index
      %c0_19 = arith.constant 0 : index
      %c0_20 = arith.constant 0 : index
      %21 = vector.load %arg6[%c0_18, %c0_19, %c0_20] : memref<3x1x128xf32, #tpu.memory_space<vmem>>, vector<1x1x128xf32>
      %22 = vector.shape_cast %21 : vector<1x1x128xf32> to vector<1x128xf32>
      %23 = vector.broadcast %22 : vector<1x128xf32> to vector<8x128xf32>
      %24 = arith.addf %20, %23 : vector<8x128xf32>
      %cst_21 = arith.constant dense<0.000000e+00> : vector<8xf32>
      %25 = vector.multi_reduction <add>, %24, %cst_21 [1] : vector<8x128xf32> to vector<8xf32>
      %26 = vector.shape_cast %25 : vector<8xf32> to vector<8x1xf32>
      %cst_22 = arith.constant 1.280000e+02 : f32
      %27 = vector.broadcast %cst_22 : f32 to vector<8x1xf32>
      %28 = arith.divf %26, %27 : vector<8x1xf32>
      %29 = vector.broadcast %28 : vector<8x1xf32> to vector<8x128xf32>
      %30 = arith.subf %24, %29 : vector<8x128xf32>
      %31 = arith.mulf %30, %30 : vector<8x128xf32>
      %cst_23 = arith.constant dense<0.000000e+00> : vector<8xf32>
      %32 = vector.multi_reduction <add>, %31, %cst_23 [1] : vector<8x128xf32> to vector<8xf32>
      %33 = vector.shape_cast %32 : vector<8xf32> to vector<8x1xf32>
      %cst_24 = arith.constant 1.280000e+02 : f32
      %34 = vector.broadcast %cst_24 : f32 to vector<8x1xf32>
      %35 = arith.divf %33, %34 : vector<8x1xf32>
      %36 = vector.broadcast %28 : vector<8x1xf32> to vector<8x128xf32>
      %37 = arith.subf %24, %36 : vector<8x128xf32>
      %cst_25 = arith.constant 9.99999974E-6 : f32
      %38 = vector.broadcast %cst_25 : f32 to vector<8x1xf32>
      %39 = arith.addf %35, %38 : vector<8x1xf32>
      %40 = math.rsqrt %39 : vector<8x1xf32>
      %41 = vector.broadcast %40 : vector<8x1xf32> to vector<8x128xf32>
      %42 = arith.mulf %37, %41 : vector<8x128xf32>
      %c0_26 = arith.constant 0 : index
      %c0_27 = arith.constant 0 : index
      %c0_28 = arith.constant 0 : index
      %43 = vector.load %arg7[%c0_26, %c0_27, %c0_28] : memref<3x1x128xf32, #tpu.memory_space<vmem>>, vector<1x1x128xf32>
      %44 = vector.shape_cast %43 : vector<1x1x128xf32> to vector<1x128xf32>
      %45 = vector.broadcast %44 : vector<1x128xf32> to vector<8x128xf32>
      %46 = arith.mulf %42, %45 : vector<8x128xf32>
      %c0_29 = arith.constant 0 : index
      %c0_30 = arith.constant 0 : index
      %c0_31 = arith.constant 0 : index
      %47 = vector.load %arg8[%c0_29, %c0_30, %c0_31] : memref<3x1x128xf32, #tpu.memory_space<vmem>>, vector<1x1x128xf32>
      %48 = vector.shape_cast %47 : vector<1x1x128xf32> to vector<1x128xf32>
      %49 = vector.broadcast %48 : vector<1x128xf32> to vector<8x128xf32>
      %50 = arith.addf %46, %49 : vector<8x128xf32>
      %cst_32 = arith.constant 0.000000e+00 : f32
      %51 = vector.broadcast %cst_32 : f32 to vector<8x128xf32>
      %52 = arith.maximumf %50, %51 : vector<8x128xf32>
      %53 = arith.addf %17, %52 : vector<8x128xf32>
      %cst_33 = arith.constant 0.000000e+00 : f32
      %54 = vector.broadcast %cst_33 : f32 to vector<8x128xf32>
      %55 = arith.maximumf %53, %54 : vector<8x128xf32>
      %c1 = arith.constant 1 : index
      %c0_34 = arith.constant 0 : index
      %c0_35 = arith.constant 0 : index
      %56 = vector.load %arg5[%c1, %c0_34, %c0_35] : memref<3x128x128xf32, #tpu.memory_space<vmem>>, vector<1x128x128xf32>
      %57 = vector.shape_cast %56 : vector<1x128x128xf32> to vector<128x128xf32>
      %cst_36 = arith.constant dense<0.000000e+00> : vector<8x128xf32>
      %58 = tpu.matmul %55, %57, %cst_36 {dimension_numbers = #tpu.dot_dimension_numbers<[1], [0], [0], [1], [0, 0, 1, 1], [], []>} : vector<8x128xf32>, vector<128x128xf32>, vector<8x128xf32> -> vector<8x128xf32>
      %c1_37 = arith.constant 1 : index
      %c0_38 = arith.constant 0 : index
      %c0_39 = arith.constant 0 : index
      %59 = vector.load %arg6[%c1_37, %c0_38, %c0_39] : memref<3x1x128xf32, #tpu.memory_space<vmem>>, vector<1x1x128xf32>
      %60 = vector.shape_cast %59 : vector<1x1x128xf32> to vector<1x128xf32>
      %61 = vector.broadcast %60 : vector<1x128xf32> to vector<8x128xf32>
      %62 = arith.addf %58, %61 : vector<8x128xf32>
      %cst_40 = arith.constant dense<0.000000e+00> : vector<8xf32>
      %63 = vector.multi_reduction <add>, %62, %cst_40 [1] : vector<8x128xf32> to vector<8xf32>
      %64 = vector.shape_cast %63 : vector<8xf32> to vector<8x1xf32>
      %cst_41 = arith.constant 1.280000e+02 : f32
      %65 = vector.broadcast %cst_41 : f32 to vector<8x1xf32>
      %66 = arith.divf %64, %65 : vector<8x1xf32>
      %67 = vector.broadcast %66 : vector<8x1xf32> to vector<8x128xf32>
      %68 = arith.subf %62, %67 : vector<8x128xf32>
      %69 = arith.mulf %68, %68 : vector<8x128xf32>
      %cst_42 = arith.constant dense<0.000000e+00> : vector<8xf32>
      %70 = vector.multi_reduction <add>, %69, %cst_42 [1] : vector<8x128xf32> to vector<8xf32>
      %71 = vector.shape_cast %70 : vector<8xf32> to vector<8x1xf32>
      %cst_43 = arith.constant 1.280000e+02 : f32
      %72 = vector.broadcast %cst_43 : f32 to vector<8x1xf32>
      %73 = arith.divf %71, %72 : vector<8x1xf32>
      %74 = vector.broadcast %66 : vector<8x1xf32> to vector<8x128xf32>
      %75 = arith.subf %62, %74 : vector<8x128xf32>
      %cst_44 = arith.constant 9.99999974E-6 : f32
      %76 = vector.broadcast %cst_44 : f32 to vector<8x1xf32>
      %77 = arith.addf %73, %76 : vector<8x1xf32>
      %78 = math.rsqrt %77 : vector<8x1xf32>
      %79 = vector.broadcast %78 : vector<8x1xf32> to vector<8x128xf32>
      %80 = arith.mulf %75, %79 : vector<8x128xf32>
      %c1_45 = arith.constant 1 : index
      %c0_46 = arith.constant 0 : index
      %c0_47 = arith.constant 0 : index
      %81 = vector.load %arg7[%c1_45, %c0_46, %c0_47] : memref<3x1x128xf32, #tpu.memory_space<vmem>>, vector<1x1x128xf32>
      %82 = vector.shape_cast %81 : vector<1x1x128xf32> to vector<1x128xf32>
      %83 = vector.broadcast %82 : vector<1x128xf32> to vector<8x128xf32>
      %84 = arith.mulf %80, %83 : vector<8x128xf32>
      %c1_48 = arith.constant 1 : index
      %c0_49 = arith.constant 0 : index
      %c0_50 = arith.constant 0 : index
      %85 = vector.load %arg8[%c1_48, %c0_49, %c0_50] : memref<3x1x128xf32, #tpu.memory_space<vmem>>, vector<1x1x128xf32>
      %86 = vector.shape_cast %85 : vector<1x1x128xf32> to vector<1x128xf32>
      %87 = vector.broadcast %86 : vector<1x128xf32> to vector<8x128xf32>
      %88 = arith.addf %84, %87 : vector<8x128xf32>
      %cst_51 = arith.constant 0.000000e+00 : f32
      %89 = vector.broadcast %cst_51 : f32 to vector<8x128xf32>
      %90 = arith.maximumf %88, %89 : vector<8x128xf32>
      %91 = arith.addf %55, %90 : vector<8x128xf32>
      %cst_52 = arith.constant 0.000000e+00 : f32
      %92 = vector.broadcast %cst_52 : f32 to vector<8x128xf32>
      %93 = arith.maximumf %91, %92 : vector<8x128xf32>
      %c2 = arith.constant 2 : index
      %c0_53 = arith.constant 0 : index
      %c0_54 = arith.constant 0 : index
      %94 = vector.load %arg5[%c2, %c0_53, %c0_54] : memref<3x128x128xf32, #tpu.memory_space<vmem>>, vector<1x128x128xf32>
      %95 = vector.shape_cast %94 : vector<1x128x128xf32> to vector<128x128xf32>
      %cst_55 = arith.constant dense<0.000000e+00> : vector<8x128xf32>
      %96 = tpu.matmul %93, %95, %cst_55 {dimension_numbers = #tpu.dot_dimension_numbers<[1], [0], [0], [1], [0, 0, 1, 1], [], []>} : vector<8x128xf32>, vector<128x128xf32>, vector<8x128xf32> -> vector<8x128xf32>
      %c2_56 = arith.constant 2 : index
      %c0_57 = arith.constant 0 : index
      %c0_58 = arith.constant 0 : index
      %97 = vector.load %arg6[%c2_56, %c0_57, %c0_58] : memref<3x1x128xf32, #tpu.memory_space<vmem>>, vector<1x1x128xf32>
      %98 = vector.shape_cast %97 : vector<1x1x128xf32> to vector<1x128xf32>
      %99 = vector.broadcast %98 : vector<1x128xf32> to vector<8x128xf32>
      %100 = arith.addf %96, %99 : vector<8x128xf32>
      %cst_59 = arith.constant dense<0.000000e+00> : vector<8xf32>
      %101 = vector.multi_reduction <add>, %100, %cst_59 [1] : vector<8x128xf32> to vector<8xf32>
      %102 = vector.shape_cast %101 : vector<8xf32> to vector<8x1xf32>
      %cst_60 = arith.constant 1.280000e+02 : f32
      %103 = vector.broadcast %cst_60 : f32 to vector<8x1xf32>
      %104 = arith.divf %102, %103 : vector<8x1xf32>
      %105 = vector.broadcast %104 : vector<8x1xf32> to vector<8x128xf32>
      %106 = arith.subf %100, %105 : vector<8x128xf32>
      %107 = arith.mulf %106, %106 : vector<8x128xf32>
      %cst_61 = arith.constant dense<0.000000e+00> : vector<8xf32>
      %108 = vector.multi_reduction <add>, %107, %cst_61 [1] : vector<8x128xf32> to vector<8xf32>
      %109 = vector.shape_cast %108 : vector<8xf32> to vector<8x1xf32>
      %cst_62 = arith.constant 1.280000e+02 : f32
      %110 = vector.broadcast %cst_62 : f32 to vector<8x1xf32>
      %111 = arith.divf %109, %110 : vector<8x1xf32>
      %112 = vector.broadcast %104 : vector<8x1xf32> to vector<8x128xf32>
      %113 = arith.subf %100, %112 : vector<8x128xf32>
      %cst_63 = arith.constant 9.99999974E-6 : f32
      %114 = vector.broadcast %cst_63 : f32 to vector<8x1xf32>
      %115 = arith.addf %111, %114 : vector<8x1xf32>
      %116 = math.rsqrt %115 : vector<8x1xf32>
      %117 = vector.broadcast %116 : vector<8x1xf32> to vector<8x128xf32>
      %118 = arith.mulf %113, %117 : vector<8x128xf32>
      %c2_64 = arith.constant 2 : index
      %c0_65 = arith.constant 0 : index
      %c0_66 = arith.constant 0 : index
      %119 = vector.load %arg7[%c2_64, %c0_65, %c0_66] : memref<3x1x128xf32, #tpu.memory_space<vmem>>, vector<1x1x128xf32>
      %120 = vector.shape_cast %119 : vector<1x1x128xf32> to vector<1x128xf32>
      %121 = vector.broadcast %120 : vector<1x128xf32> to vector<8x128xf32>
      %122 = arith.mulf %118, %121 : vector<8x128xf32>
      %c2_67 = arith.constant 2 : index
      %c0_68 = arith.constant 0 : index
      %c0_69 = arith.constant 0 : index
      %123 = vector.load %arg8[%c2_67, %c0_68, %c0_69] : memref<3x1x128xf32, #tpu.memory_space<vmem>>, vector<1x1x128xf32>
      %124 = vector.shape_cast %123 : vector<1x1x128xf32> to vector<1x128xf32>
      %125 = vector.broadcast %124 : vector<1x128xf32> to vector<8x128xf32>
      %126 = arith.addf %122, %125 : vector<8x128xf32>
      %cst_70 = arith.constant 0.000000e+00 : f32
      %127 = vector.broadcast %cst_70 : f32 to vector<8x128xf32>
      %128 = arith.maximumf %126, %127 : vector<8x128xf32>
      %129 = arith.addf %93, %128 : vector<8x128xf32>
      %cst_71 = arith.constant 0.000000e+00 : f32
      %130 = vector.broadcast %cst_71 : f32 to vector<8x128xf32>
      %131 = arith.maximumf %129, %130 : vector<8x128xf32>
      %c0_72 = arith.constant 0 : index
      %c0_73 = arith.constant 0 : index
      %132 = vector.load %arg9[%c0_72, %c0_73] : memref<128x128xf32, #tpu.memory_space<vmem>>, vector<128x128xf32>
      %cst_74 = arith.constant dense<0.000000e+00> : vector<8x128xf32>
      %133 = tpu.matmul %131, %132, %cst_74 {dimension_numbers = #tpu.dot_dimension_numbers<[1], [0], [0], [1], [0, 0, 1, 1], [], []>} : vector<8x128xf32>, vector<128x128xf32>, vector<8x128xf32> -> vector<8x128xf32>
      %c0_75 = arith.constant 0 : index
      %c0_76 = arith.constant 0 : index
      %134 = vector.load %arg10[%c0_75, %c0_76] : memref<8x128xf32, #tpu.memory_space<vmem>>, vector<8x128xf32>
      tpu.vector_store %arg10[%c0_75, %c0_76], %133 {strides = array<i32>} : memref<8x128xf32, #tpu.memory_space<vmem>>, vector<8x128xf32>,
    } else {
    }
    return
  }
  func.func @transform_0(%arg0: i32, %arg1: i32) -> (i32, i32) {
    %c0_i32 = arith.constant 0 : i32
    return %arg0, %arg1 : i32, i32
  }
  func.func @transform_1(%arg0: i32, %arg1: i32) -> (i32, i32) {
    %c0_i32 = arith.constant 0 : i32
    %c0_i32_0 = arith.constant 0 : i32
    return %arg1, %c0_i32 : i32, i32
  }
  func.func @transform_2(%arg0: i32, %arg1: i32) -> (i32, i32) {
    %c0_i32 = arith.constant 0 : i32
    %c0_i32_0 = arith.constant 0 : i32
    %c0_i32_1 = arith.constant 0 : i32
    return %c0_i32, %c0_i32_0 : i32, i32
  }
  func.func @transform_3(%arg0: i32, %arg1: i32) -> (i32, i32, i32) {
    %c0_i32 = arith.constant 0 : i32
    %c0_i32_0 = arith.constant 0 : i32
    %c0_i32_1 = arith.constant 0 : i32
    %c0_i32_2 = arith.constant 0 : i32
    return %c0_i32, %c0_i32_0, %c0_i32_1 : i32, i32, i32
  }
  func.func @transform_4(%arg0: i32, %arg1: i32) -> (i32, i32, i32) {
    %c0_i32 = arith.constant 0 : i32
    %c0_i32_0 = arith.constant 0 : i32
    %c0_i32_1 = arith.constant 0 : i32
    %c0_i32_2 = arith.constant 0 : i32
    return %c0_i32, %c0_i32_0, %c0_i32_1 : i32, i32, i32
  }
  func.func @transform_5(%arg0: i32, %arg1: i32) -> (i32, i32, i32) {
    %c0_i32 = arith.constant 0 : i32
    %c0_i32_0 = arith.constant 0 : i32
    %c0_i32_1 = arith.constant 0 : i32
    %c0_i32_2 = arith.constant 0 : i32
    return %c0_i32, %c0_i32_0, %c0_i32_1 : i32, i32, i32
  }
  func.func @transform_6(%arg0: i32, %arg1: i32) -> (i32, i32, i32) {
    %c0_i32 = arith.constant 0 : i32
    %c0_i32_0 = arith.constant 0 : i32
    %c0_i32_1 = arith.constant 0 : i32
    %c0_i32_2 = arith.constant 0 : i32
    return %c0_i32, %c0_i32_0, %c0_i32_1 : i32, i32, i32
  }
  func.func @transform_7(%arg0: i32, %arg1: i32) -> (i32, i32) {
    %c0_i32 = arith.constant 0 : i32
    %c0_i32_0 = arith.constant 0 : i32
    %c0_i32_1 = arith.constant 0 : i32
    return %c0_i32, %c0_i32_0 : i32, i32
  }
  func.func @transform_8(%arg0: i32, %arg1: i32) -> (i32, i32) {
    %c0_i32 = arith.constant 0 : i32
    %c0_i32_0 = arith.constant 0 : i32
    return %arg0, %c0_i32 : i32, i32
  }
}

</mosaic_0001>

<llo_original>
// kernel: tpu_custom_call.1
$region0: #{tpu_custom_call.1}
  #allocation0 [shape = 'u32[]', space=smem, size = 0x4, offset = 0x4, fixed_abs, tag = 'smem constant byte address 0x4 - core index']
  #allocation1 [shape = 'u32[144,128]{1,0:T(1,128)}', space=vmem, size = 0x12000, scoped, tag = 'internal scratch']
  #allocation2 [shape = 'f32[8,128]{1,0:T(8,128)}', space=vmem, size = 0x1000, scoped, tag = 'scratch operand']
  %s0 = inlined_call_operand.hbm [shape: f32[8,768], index: 0, kind: input, shape index: {}]
  %s1 = inlined_call_operand.hbm [shape: f32[768,128], index: 1, kind: input, shape index: {}]
  %s2 = inlined_call_operand.vmem [shape: f32[1,128], index: 2, kind: input, shape index: {}]
  %s3 = inlined_call_operand.hbm [shape: f32[3,128,128], index: 3, kind: input, shape index: {}]
  %s4 = inlined_call_operand.vmem [shape: f32[3,1,128], index: 4, kind: input, shape index: {}]
  %s5 = inlined_call_operand.vmem [shape: f32[3,1,128], index: 5, kind: input, shape index: {}]
  %s6 = inlined_call_operand.vmem [shape: f32[3,1,128], index: 6, kind: input, shape index: {}]
  %s7 = inlined_call_operand.hbm [shape: f32[128,128], index: 7, kind: input, shape index: {}]
  %s8 = inlined_call_operand.hbm [shape: f32[8,128], index: 8, kind: output, shape index: {}]
  %s9 = sld [smem:[#allocation0]]
  $region89: #{tpu_custom_call.1} parent=0
    _
  %s11 = ssub.s32 1, %s9
  %s12 = scalar_select 0, %s11, %s9
  $region1: #{tpu_custom_call.1} parent=0
    #allocation3 [shape = 'u8[16384]{0}', space=vmem, size = 0x4000, scoped, tag = 'input window, operand 0']
    #allocation4 [shape = 's32[2]{0}', space=sflag, size = 0x8, scoped, tag = 'scoped memory for tpu_custom_call.1']
    #allocation5 [shape = 's32[2]{0}', space=sflag, size = 0x8, scoped, tag = 'scoped memory for tpu_custom_call.1']
    #allocation6 [shape = 'u8[262144]{0}', space=vmem, size = 0x40000, scoped, tag = 'input window, operand 1']
    #allocation7 [shape = 's32[2]{0}', space=sflag, size = 0x8, scoped, tag = 'scoped memory for tpu_custom_call.1']
    #allocation8 [shape = 'u8[196608]{0}', space=vmem, size = 0x30000, scoped, tag = 'input window, operand 3, single buffered']
    #allocation9 [shape = 'u8[65536]{0}', space=vmem, size = 0x10000, scoped, tag = 'input window, operand 7, single buffered']
    #allocation10 [shape = 's32[1]{0}', space=sflag, size = 0x4, scoped, tag = 'scoped memory for tpu_custom_call.1']
    #allocation11 [shape = 'u8[4096]{0}', space=vmem, size = 0x1000, scoped, tag = 'output window, operand 0, single buffered']
    %13 = vsyncpa [#allocation4], 0
    %s14 = scalar_lea.sflag [#allocation4], 1
    %15 = vsyncpa %s14, 0
    %16 = vsyncpa [#allocation7], 0
    %s17 = scalar_lea.sflag [#allocation7], 1
    %18 = vsyncpa %s17, 0
    %19 = vsyncpa [#allocation10], 0
    %20 = vsyncpa [#allocation5], 0
    loop: start=0, step=1, limit=5
    $region2: #{tpu_custom_call.1} parent=1 // loop_pre_header
      _
    $region3: #{tpu_custom_call.1} parent=1 // loop_header
      %s22 = sphi 0, %s26
      %p23 = scmp.ge.s32.totalorder %s22, 5
      %s29 = sphi 0, %s41
      %s30 = sphi 0, %s37
      %s31 = sphi 0, %s29
      %s32 = sphi 0, %s30
      %s33 = sphi 0, %s31
      %s34 = sphi 0, %s32
      %s46 = sphi 0, %s48
      %s49 = sphi 0, %s46
      %s50 = sphi 0, %s49
      %s66 = sphi 0, %s50
      %s72 = sphi 0, %s74
      %s75 = sphi 0, %s72
      %s76 = sphi 0, %s75
      %s92 = sphi 0, %s76
      %s96 = sphi 0, %s96
      %s98 = sphi 0, %s96
      %s99 = sphi 0, %s98
      %s113 = sphi 0, %s99
      %s117 = sphi 0, %s117
      %s119 = sphi 0, %s117
      %s120 = sphi 0, %s119
      %s134 = sphi 0, %s120
      %s138 = sphi 0, %s138
      %s140 = sphi 0, %s138
      %s141 = sphi 0, %s140
      %s155 = sphi 0, %s141
      %s159 = sphi 0, %s159
      %s161 = sphi 0, %s159
      %s162 = sphi 0, %s161
      %s176 = sphi 0, %s162
      %s180 = sphi 0, %s180
      %s182 = sphi 0, %s180
      %s183 = sphi 0, %s182
      %s197 = sphi 0, %s183
      %s201 = sphi 0, %s201
      %s203 = sphi 0, %s201
      %s204 = sphi 0, %s203
      %s218 = sphi 0, %s204
      %s224 = sphi 0, %s226
      %s227 = sphi 0, %s224
      %s228 = sphi 0, %s227
      %s244 = sphi 0, %s228
    $region4: #{tpu_custom_call.1} parent=1 // loop_header_branch
      %25 = sbr.rel (%p23) target = $region8
    $region5: #{tpu_custom_call.1} parent=1 // loop_body
      %s27 = ssub.s32 %s22, 1
      %s28 = ssub.s32 %s22, 2
      %s35 = sadd.s32 1, %s30
      %p36 = scmp.ge.s32.totalorder %s35, 3
      %s37 = scalar_select %p36, 0, %s35
      %s38 = sadd.s32 1, %s29
      %s39 = scalar_select %p36, %s38, %s29
      %p40 = scmp.ge.s32.totalorder %s39, 1
      %s41 = scalar_select %p40, 0, %s39
      %s42 = ssub.s32 %s29, %s41
      %s43 = ssub.s32 %s30, %s37
      %s44 = sor.u32 %s42, %s43
      %p45 = scmp.eq.s32.totalorder %s44, 0
      %s47 = sadd.s32 %s46, 1
      %s48 = scalar_select %p45, %s46, %s47
      %p51 = pneg %p45
      %p52 = scmp.eq.s32.totalorder %s22, 2
      %p53 = por %p51, %p52
      %p54 = scmp.ne.s32.totalorder %s46, %s49
      %p55 = scmp.eq.s32.totalorder %s22, 0
      %p56 = por %p54, %p55
      %p57 = scmp.ne.s32.totalorder %s46, %s49
      %p58 = scmp.eq.s32.totalorder %s27, 2
      %p59 = por %p57, %p58
      %p60 = scmp.ne.s32.totalorder %s49, %s50
      %p61 = scmp.eq.s32.totalorder %s27, 0
      %p62 = por %p60, %p61
      %p63 = scmp.ne.s32.totalorder %s49, %s50
      %p64 = scmp.eq.s32.totalorder %s28, 2
      %p65 = por %p63, %p64
      %p67 = scmp.ne.s32.totalorder %s50, %s66
      %p68 = scmp.eq.s32.totalorder %s28, 0
      %p69 = por %p67, %p68
      %s70 = ssub.s32 %s30, %s37
      %p71 = scmp.eq.s32.totalorder %s70, 0
      %s73 = sadd.s32 %s72, 1
      %s74 = scalar_select %p71, %s72, %s73
      %p77 = pneg %p71
      %p78 = scmp.eq.s32.totalorder %s22, 2
      %p79 = por %p77, %p78
      %p80 = scmp.ne.s32.totalorder %s72, %s75
      %p81 = scmp.eq.s32.totalorder %s22, 0
      %p82 = por %p80, %p81
      %p83 = scmp.ne.s32.totalorder %s72, %s75
      %p84 = scmp.eq.s32.totalorder %s27, 2
      %p85 = por %p83, %p84
      %p86 = scmp.ne.s32.totalorder %s75, %s76
      %p87 = scmp.eq.s32.totalorder %s27, 0
      %p88 = por %p86, %p87
      %p89 = scmp.ne.s32.totalorder %s75, %s76
      %p90 = scmp.eq.s32.totalorder %s28, 2
      %p91 = por %p89, %p90
      %p93 = scmp.ne.s32.totalorder %s76, %s92
      %p94 = scmp.eq.s32.totalorder %s28, 0
      %p95 = por %p93, %p94
      %s97 = sadd.s32 %s96, 1
      %p100 = scmp.eq.s32.totalorder %s22, 2
      %p101 = scmp.ne.s32.totalorder %s96, %s98
      %p102 = scmp.eq.s32.totalorder %s22, 0
      %p103 = por %p101, %p102
      %p104 = scmp.ne.s32.totalorder %s96, %s98
      %p105 = scmp.eq.s32.totalorder %s27, 2
      %p106 = por %p104, %p105
      %p107 = scmp.ne.s32.totalorder %s98, %s99
      %p108 = scmp.eq.s32.totalorder %s27, 0
      %p109 = por %p107, %p108
      %p110 = scmp.ne.s32.totalorder %s98, %s99
      %p111 = scmp.eq.s32.totalorder %s28, 2
      %p112 = por %p110, %p111
      %p114 = scmp.ne.s32.totalorder %s99, %s113
      %p115 = scmp.eq.s32.totalorder %s28, 0
      %p116 = por %p114, %p115
      %s118 = sadd.s32 %s117, 1
      %p121 = scmp.eq.s32.totalorder %s22, 2
      %p122 = scmp.ne.s32.totalorder %s117, %s119
      %p123 = scmp.eq.s32.totalorder %s22, 0
      %p124 = por %p122, %p123
      %p125 = scmp.ne.s32.totalorder %s117, %s119
      %p126 = scmp.eq.s32.totalorder %s27, 2
      %p127 = por %p125, %p126
      %p128 = scmp.ne.s32.totalorder %s119, %s120
      %p129 = scmp.eq.s32.totalorder %s27, 0
      %p130 = por %p128, %p129
      %p131 = scmp.ne.s32.totalorder %s119, %s120
      %p132 = scmp.eq.s32.totalorder %s28, 2
      %p133 = por %p131, %p132
      %p135 = scmp.ne.s32.totalorder %s120, %s134
      %p136 = scmp.eq.s32.totalorder %s28, 0
      %p137 = por %p135, %p136
      %s139 = sadd.s32 %s138, 1
      %p142 = scmp.eq.s32.totalorder %s22, 2
      %p143 = scmp.ne.s32.totalorder %s138, %s140
      %p144 = scmp.eq.s32.totalorder %s22, 0
      %p145 = por %p143, %p144
      %p146 = scmp.ne.s32.totalorder %s138, %s140
      %p147 = scmp.eq.s32.totalorder %s27, 2
      %p148 = por %p146, %p147
      %p149 = scmp.ne.s32.totalorder %s140, %s141
      %p150 = scmp.eq.s32.totalorder %s27, 0
      %p151 = por %p149, %p150
      %p152 = scmp.ne.s32.totalorder %s140, %s141
      %p153 = scmp.eq.s32.totalorder %s28, 2
      %p154 = por %p152, %p153
      %p156 = scmp.ne.s32.totalorder %s141, %s155
      %p157 = scmp.eq.s32.totalorder %s28, 0
      %p158 = por %p156, %p157
      %s160 = sadd.s32 %s159, 1
      %p163 = scmp.eq.s32.totalorder %s22, 2
      %p164 = scmp.ne.s32.totalorder %s159, %s161
      %p165 = scmp.eq.s32.totalorder %s22, 0
      %p166 = por %p164, %p165
      %p167 = scmp.ne.s32.totalorder %s159, %s161
      %p168 = scmp.eq.s32.totalorder %s27, 2
      %p169 = por %p167, %p168
      %p170 = scmp.ne.s32.totalorder %s161, %s162
      %p171 = scmp.eq.s32.totalorder %s27, 0
      %p172 = por %p170, %p171
      %p173 = scmp.ne.s32.totalorder %s161, %s162
      %p174 = scmp.eq.s32.totalorder %s28, 2
      %p175 = por %p173, %p174
      %p177 = scmp.ne.s32.totalorder %s162, %s176
      %p178 = scmp.eq.s32.totalorder %s28, 0
      %p179 = por %p177, %p178
      %s181 = sadd.s32 %s180, 1
      %p184 = scmp.eq.s32.totalorder %s22, 2
      %p185 = scmp.ne.s32.totalorder %s180, %s182
      %p186 = scmp.eq.s32.totalorder %s22, 0
      %p187 = por %p185, %p186
      %p188 = scmp.ne.s32.totalorder %s180, %s182
      %p189 = scmp.eq.s32.totalorder %s27, 2
      %p190 = por %p188, %p189
      %p191 = scmp.ne.s32.totalorder %s182, %s183
      %p192 = scmp.eq.s32.totalorder %s27, 0
      %p193 = por %p191, %p192
      %p194 = scmp.ne.s32.totalorder %s182, %s183
      %p195 = scmp.eq.s32.totalorder %s28, 2
      %p196 = por %p194, %p195
      %p198 = scmp.ne.s32.totalorder %s183, %s197
      %p199 = scmp.eq.s32.totalorder %s28, 0
      %p200 = por %p198, %p199
      %s202 = sadd.s32 %s201, 1
      %p205 = scmp.eq.s32.totalorder %s22, 2
      %p206 = scmp.ne.s32.totalorder %s201, %s203
      %p207 = scmp.eq.s32.totalorder %s22, 0
      %p208 = por %p206, %p207
      %p209 = scmp.ne.s32.totalorder %s201, %s203
      %p210 = scmp.eq.s32.totalorder %s27, 2
      %p211 = por %p209, %p210
      %p212 = scmp.ne.s32.totalorder %s203, %s204
      %p213 = scmp.eq.s32.totalorder %s27, 0
      %p214 = por %p212, %p213
      %p215 = scmp.ne.s32.totalorder %s203, %s204
      %p216 = scmp.eq.s32.totalorder %s28, 2
      %p217 = por %p215, %p216
      %p219 = scmp.ne.s32.totalorder %s204, %s218
      %p220 = scmp.eq.s32.totalorder %s28, 0
      %p221 = por %p219, %p220
      %s222 = ssub.s32 %s29, %s41
      %p223 = scmp.eq.s32.totalorder %s222, 0
      %s225 = sadd.s32 %s224, 1
      %s226 = scalar_select %p223, %s224, %s225
      %p229 = pneg %p223
      %p230 = scmp.eq.s32.totalorder %s22, 2
      %p231 = por %p229, %p230
      %p232 = scmp.ne.s32.totalorder %s224, %s227
      %p233 = scmp.eq.s32.totalorder %s22, 0
      %p234 = por %p232, %p233
      %p235 = scmp.ne.s32.totalorder %s224, %s227
      %p236 = scmp.eq.s32.totalorder %s27, 2
      %p237 = por %p235, %p236
      %p238 = scmp.ne.s32.totalorder %s227, %s228
      %p239 = scmp.eq.s32.totalorder %s27, 0
      %p240 = por %p238, %p239
      %p241 = scmp.ne.s32.totalorder %s227, %s228
      %p242 = scmp.eq.s32.totalorder %s28, 2
      %p243 = por %p241, %p242
      %p245 = scmp.ne.s32.totalorder %s228, %s244
      %p246 = scmp.eq.s32.totalorder %s28, 0
      %p247 = por %p245, %p246
      %p248 = scmp.le.s32.totalorder 1, %s22
      %p249 = scmp.lt.s32.totalorder %s22, 4
      %p250 = pnand %p248, %p249
      %p251 = pneg %p250
      // Predicated region
      $region9: #{tpu_custom_call.1} parent=5 // pred_check
        _
      $region10: #{tpu_custom_call.1} parent=5 // pred_check_branch
        %253 = sbr.rel (%p250) target = $region12
      $region11: #{tpu_custom_call.1} parent=5 // pred_region
        %s254 = ssub.s32 %s22, 1
        // Predicated region
        $region13: #{tpu_custom_call.1} parent=11 // pred_check
          %p255 = pneg %p109
        $region14: #{tpu_custom_call.1} parent=11 // pred_check_branch
          %257 = sbr.rel (%p255) target = $region16
        $region15: #{tpu_custom_call.1} parent=11 // pred_region
          _
        $region16: #{tpu_custom_call.1} parent=11 // pred_fallthru
          _
        // Predicated region
        $region17: #{tpu_custom_call.1} parent=11 // pred_check
          %p258 = pneg %p130
        $region18: #{tpu_custom_call.1} parent=11 // pred_check_branch
          %260 = sbr.rel (%p258) target = $region20
        $region19: #{tpu_custom_call.1} parent=11 // pred_region
          %s262 = ssub.s32 6144, 6144
          %263 = vsyncadd [#allocation7], %s262
          %s264 = sshll.u32 [#allocation8], 4
          %s265 = int_to_ptr.vmem [resolvable:$true] %s264
          %270 = dma.hbm_to_vmem [thread:$0]  %s3, 6144, %s265, [#allocation7], 128, 128, 8
        $region20: #{tpu_custom_call.1} parent=11 // pred_fallthru
          _
        // Predicated region
        $region21: #{tpu_custom_call.1} parent=11 // pred_check
          %p271 = pneg %p151
        $region22: #{tpu_custom_call.1} parent=11 // pred_check_branch
          %273 = sbr.rel (%p271) target = $region24
        $region23: #{tpu_custom_call.1} parent=11 // pred_region
          _
        $region24: #{tpu_custom_call.1} parent=11 // pred_fallthru
          _
        // Predicated region
        $region25: #{tpu_custom_call.1} parent=11 // pred_check
          %p274 = pneg %p172
        $region26: #{tpu_custom_call.1} parent=11 // pred_check_branch
          %276 = sbr.rel (%p274) target = $region28
        $region27: #{tpu_custom_call.1} parent=11 // pred_region
          _
        $region28: #{tpu_custom_call.1} parent=11 // pred_fallthru
          _
        // Predicated region
        $region29: #{tpu_custom_call.1} parent=11 // pred_check
          %p277 = pneg %p193
        $region30: #{tpu_custom_call.1} parent=11 // pred_check_branch
          %279 = sbr.rel (%p277) target = $region32
        $region31: #{tpu_custom_call.1} parent=11 // pred_region
          _
        $region32: #{tpu_custom_call.1} parent=11 // pred_fallthru
          _
        // Predicated region
        $region33: #{tpu_custom_call.1} parent=11 // pred_check
          %p280 = pneg %p214
        $region34: #{tpu_custom_call.1} parent=11 // pred_check_branch
          %282 = sbr.rel (%p280) target = $region36
        $region35: #{tpu_custom_call.1} parent=11 // pred_region
          %s284 = ssub.s32 2048, 2048
          %285 = vsyncadd [#allocation10], %s284
          %s286 = sshll.u32 [#allocation9], 4
          %s287 = int_to_ptr.vmem [resolvable:$true] %s286
          %292 = dma.hbm_to_vmem [thread:$0]  %s7, 2048, %s287, [#allocation10], 128, 128, 8
        $region36: #{tpu_custom_call.1} parent=11 // pred_fallthru
          _
      $region12: #{tpu_custom_call.1} parent=5 // pred_fallthru
        _
      %p293 = scmp.lt.s32.totalorder %s22, 3
      // Predicated region
      $region37: #{tpu_custom_call.1} parent=5 // pred_check
        %p294 = pneg %p293
      $region38: #{tpu_custom_call.1} parent=5 // pred_check_branch
        %296 = sbr.rel (%p294) target = $region40
      $region39: #{tpu_custom_call.1} parent=5 // pred_region
        // Predicated region
        $region41: #{tpu_custom_call.1} parent=39 // pred_check
          %p297 = pneg %p56
        $region42: #{tpu_custom_call.1} parent=39 // pred_check_branch
          %299 = sbr.rel (%p297) target = $region44
        $region43: #{tpu_custom_call.1} parent=39 // pred_region
          %s300 = sand.u32 %s46, 1
          %s301 = scalar_lea.sflag [#allocation4], %s300
          %s302 = sand.u32 %s46, 1
          %s303 = smul.addr %s302, 16
          %s304 = scalar_lea.vmem [#allocation3], %s303
          %s305 = smul.u32 2, %s30
          %s307 = ssub.s32 256, 256
          %308 = vsyncadd %s301, %s307
          %s309 = smul.addr %s29, 6
          %s310 = sadd.s32 %s305, %s309
          %s311 = smul.addr %s310, 128
          %s312 = scalar_lea.hbm %s0, %s311
          %s314 = sshll.u32 %s304, 4
          %s315 = int_to_ptr.vmem [resolvable:$true] %s314
          %317 = dma.hbm_to_vmem [thread:$0]  %s312, 256, %s315, %s301
        $region44: #{tpu_custom_call.1} parent=39 // pred_fallthru
          _
        // Predicated region
        $region45: #{tpu_custom_call.1} parent=39 // pred_check
          %p318 = pneg %p82
        $region46: #{tpu_custom_call.1} parent=39 // pred_check_branch
          %320 = sbr.rel (%p318) target = $region48
        $region47: #{tpu_custom_call.1} parent=39 // pred_region
          %s321 = sand.u32 %s22, 1
          %s322 = scalar_lea.sflag [#allocation7], %s321
          %s323 = sand.u32 %s72, 1
          %s324 = smul.addr %s323, 256
          %s325 = scalar_lea.vmem [#allocation6], %s324
          %s326 = smul.u32 32, %s30
          %s328 = ssub.s32 4096, 4096
          %329 = vsyncadd %s322, %s328
          %s330 = smul.addr %s326, 128
          %s331 = scalar_lea.hbm %s1, %s330
          %s332 = sshll.u32 %s325, 4
          %s333 = int_to_ptr.vmem [resolvable:$true] %s332
          %338 = dma.hbm_to_vmem [thread:$0]  %s331, 4096, %s333, %s322, 128, 128, 8
        $region48: #{tpu_custom_call.1} parent=39 // pred_fallthru
          _
      $region40: #{tpu_custom_call.1} parent=5 // pred_fallthru
        _
      %p339 = scmp.le.s32.totalorder 1, %s22
      %p340 = scmp.lt.s32.totalorder %s22, 4
      %p341 = pnand %p339, %p340
      %p342 = pneg %p341
      // Predicated region
      $region49: #{tpu_custom_call.1} parent=5 // pred_check
        _
      $region50: #{tpu_custom_call.1} parent=5 // pred_check_branch
        %344 = sbr.rel (%p341) target = $region52
      $region51: #{tpu_custom_call.1} parent=5 // pred_region
        %s345 = ssub.s32 %s22, 1
        %s346 = sand.u32 %s49, 1
        %s347 = scalar_lea.sflag [#allocation4], %s346
        %s348 = sand.u32 %s49, 1
        %s349 = smul.addr %s348, 16
        %s350 = scalar_lea.vmem [#allocation3], %s349
        // Predicated region
        $region53: #{tpu_custom_call.1} parent=51 // pred_check
          %p351 = pneg %p62
        $region54: #{tpu_custom_call.1} parent=51 // pred_check_branch
          %353 = sbr.rel (%p351) target = $region56
        $region55: #{tpu_custom_call.1} parent=51 // pred_region
          %354 = dma.done %s347, 256
        $region56: #{tpu_custom_call.1} parent=51 // pred_fallthru
          _
        %s355 = sand.u32 %s27, 1
        %s356 = scalar_lea.sflag [#allocation7], %s355
        %s357 = sand.u32 %s75, 1
        %s358 = smul.addr %s357, 256
        %s359 = scalar_lea.vmem [#allocation6], %s358
        // Predicated region
        $region57: #{tpu_custom_call.1} parent=51 // pred_check
          %p360 = pneg %p88
        $region58: #{tpu_custom_call.1} parent=51 // pred_check_branch
          %362 = sbr.rel (%p360) target = $region60
        $region59: #{tpu_custom_call.1} parent=51 // pred_region
          %363 = dma.done %s356, 4096
        $region60: #{tpu_custom_call.1} parent=51 // pred_fallthru
          _
        // Predicated region
        $region61: #{tpu_custom_call.1} parent=51 // pred_check
          %p364 = pneg %p130
        $region62: #{tpu_custom_call.1} parent=51 // pred_check_branch
          %366 = sbr.rel (%p364) target = $region64
        $region63: #{tpu_custom_call.1} parent=51 // pred_region
          %367 = dma.done [#allocation7], 6144
        $region64: #{tpu_custom_call.1} parent=51 // pred_fallthru
          _
        // Predicated region
        $region65: #{tpu_custom_call.1} parent=51 // pred_check
          %p368 = pneg %p214
        $region66: #{tpu_custom_call.1} parent=51 // pred_check_branch
          %370 = sbr.rel (%p368) target = $region68
        $region67: #{tpu_custom_call.1} parent=51 // pred_region
          %371 = dma.done [#allocation10], 2048
        $region68: #{tpu_custom_call.1} parent=51 // pred_fallthru
          _
        %s372 = sand.u32 %s49, 1
        %s373 = scalar_lea.sflag [#allocation4], %s372
        %s374 = sand.u32 %s49, 1
        %s375 = smul.addr %s374, 16
        %s376 = scalar_lea.vmem [#allocation3], %s375
        %p377 = pneg %p62
        %p378 = pneg %p59
        %s379 = sand.u32 %s27, 1
        %s380 = scalar_lea.sflag [#allocation7], %s379
        %s381 = sand.u32 %s75, 1
        %s382 = smul.addr %s381, 256
        %s383 = scalar_lea.vmem [#allocation6], %s382
        %p384 = pneg %p88
        %p385 = pneg %p85
        %p386 = pneg %p109
        %p387 = pneg %p106
        %p388 = pneg %p130
        %p389 = pneg %p127
        %p390 = pneg %p151
        %p391 = pneg %p148
        %p392 = pneg %p172
        %p393 = pneg %p169
        %p394 = pneg %p193
        %p395 = pneg %p190
        %p396 = pneg %p214
        %p397 = pneg %p211
        %p398 = pneg %p240
        %p399 = pneg %p237
        %s400 = smul.u32 2, %s32
        %s401 = smul.u32 32, %s32
        %p402 = scmp.eq.s32.totalorder %s32, 0
        // Predicated region
        $region69: #{tpu_custom_call.1} parent=51 // pred_check
          %p403 = pneg %p402
        $region70: #{tpu_custom_call.1} parent=51 // pred_check_branch
          %405 = sbr.rel (%p403) target = $region72
        $region71: #{tpu_custom_call.1} parent=51 // pred_region
          %406 = vst [vmem:[#allocation2] sm:$0xff] 0.0
        $region72: #{tpu_custom_call.1} parent=51 // pred_fallthru
          _
        %v407 = vld [vmem:[%s350] sm:$0xff]
        %v408 = vld [vmem:[%s350 + $0x8] sm:$0xff]
        %v409 = vld [vmem:[%s359] sm:$0xff]
        %v410 = vld [vmem:[%s359 + $0x8] sm:$0xff]
        %v411 = vld [vmem:[%s359 + $0x10] sm:$0xff]
        %v412 = vld [vmem:[%s359 + $0x18] sm:$0xff]
        %v413 = vld [vmem:[%s359 + $0x20] sm:$0xff]
        %v414 = vld [vmem:[%s359 + $0x28] sm:$0xff]
        %v415 = vld [vmem:[%s359 + $0x30] sm:$0xff]
        %v416 = vld [vmem:[%s359 + $0x38] sm:$0xff]
        %v417 = vld [vmem:[%s359 + $0x40] sm:$0xff]
        %v418 = vld [vmem:[%s359 + $0x48] sm:$0xff]
        %v419 = vld [vmem:[%s359 + $0x50] sm:$0xff]
        %v420 = vld [vmem:[%s359 + $0x58] sm:$0xff]
        %v421 = vld [vmem:[%s359 + $0x60] sm:$0xff]
        %v422 = vld [vmem:[%s359 + $0x68] sm:$0xff]
        %v423 = vld [vmem:[%s359 + $0x70] sm:$0xff]
        %v424 = vld [vmem:[%s359 + $0x78] sm:$0xff]
        %v425 = vld [vmem:[%s359 + $0x80] sm:$0xff]
        %v426 = vld [vmem:[%s359 + $0x88] sm:$0xff]
        %v427 = vld [vmem:[%s359 + $0x90] sm:$0xff]
        %v428 = vld [vmem:[%s359 + $0x98] sm:$0xff]
        %v429 = vld [vmem:[%s359 + $0xa0] sm:$0xff]
        %v430 = vld [vmem:[%s359 + $0xa8] sm:$0xff]
        %v431 = vld [vmem:[%s359 + $0xb0] sm:$0xff]
        %v432 = vld [vmem:[%s359 + $0xb8] sm:$0xff]
        %v433 = vld [vmem:[%s359 + $0xc0] sm:$0xff]
        %v434 = vld [vmem:[%s359 + $0xc8] sm:$0xff]
        %v435 = vld [vmem:[%s359 + $0xd0] sm:$0xff]
        %v436 = vld [vmem:[%s359 + $0xd8] sm:$0xff]
        %v437 = vld [vmem:[%s359 + $0xe0] sm:$0xff]
        %v438 = vld [vmem:[%s359 + $0xe8] sm:$0xff]
        %v439 = vld [vmem:[%s359 + $0xf0] sm:$0xff]
        %v440 = vld [vmem:[%s359 + $0xf8] sm:$0xff]
        %v441 = vld [vmem:[#allocation2] sm:$0xff]
        %442 = vmatprep.subr.mxu0 0.0
        %443 = vmatpush1.msra.mxu0 %v409
        %444 = vmatprep.subr.mxu0 0.0
        %445 = vmatpush1.msra.mxu0 %v410
        %446 = vmatprep.subr.mxu0 0.0
        %447 = vmatpush1.msra.mxu0 %v411
        %448 = vmatprep.subr.mxu0 0.0
        %449 = vmatpush1.msra.mxu0 %v412
        %450 = vmatprep.subr.mxu0 0.0
        %451 = vmatpush1.msra.mxu0 %v413
        %452 = vmatprep.subr.mxu0 0.0
        %453 = vmatpush1.msra.mxu0 %v414
        %454 = vmatprep.subr.mxu0 0.0
        %455 = vmatpush1.msra.mxu0 %v415
        %456 = vmatprep.subr.mxu0 0.0
        %457 = vmatpush1.msra.mxu0 %v416
        %458 = vmatprep.subr.mxu0 0.0
        %459 = vmatpush1.msra.mxu0 %v417
        %460 = vmatprep.subr.mxu0 0.0
        %461 = vmatpush1.msra.mxu0 %v418
        %462 = vmatprep.subr.mxu0 0.0
        %463 = vmatpush1.msra.mxu0 %v419
        %464 = vmatprep.subr.mxu0 0.0
        %465 = vmatpush1.msra.mxu0 %v420
        %466 = vmatprep.subr.mxu0 0.0
        %467 = vmatpush1.msra.mxu0 %v421
        %468 = vmatprep.subr.mxu0 0.0
        %469 = vmatpush1.msra.mxu0 %v422
        %470 = vmatprep.subr.mxu0 0.0
        %471 = vmatpush1.msra.mxu0 %v423
        %472 = vmatprep.subr.mxu0 0.0
        %473 = vmatpush1.msra.mxu0 %v424
        %474 = vmatprep.subr.mxu0 0.0
        %475 = vmatpush1.msra.mxu0 %v425
        %476 = vmatprep.subr.mxu0 0.0
        %477 = vmatpush1.msra.mxu0 %v426
        %478 = vmatprep.subr.mxu0 0.0
        %479 = vmatpush1.msra.mxu0 %v427
        %480 = vmatprep.subr.mxu0 0.0
        %481 = vmatpush1.msra.mxu0 %v428
        %482 = vmatprep.subr.mxu0 0.0
        %483 = vmatpush1.msra.mxu0 %v429
        %484 = vmatprep.subr.mxu0 0.0
        %485 = vmatpush1.msra.mxu0 %v430
        %486 = vmatprep.subr.mxu0 0.0
        %487 = vmatpush1.msra.mxu0 %v431
        %488 = vmatprep.subr.mxu0 0.0
        %489 = vmatpush1.msra.mxu0 %v432
        %490 = vmatprep.subr.mxu0 0.0
        %491 = vmatpush1.msra.mxu0 %v433
        %492 = vmatprep.subr.mxu0 0.0
        %493 = vmatpush1.msra.mxu0 %v434
        %494 = vmatprep.subr.mxu0 0.0
        %495 = vmatpush1.msra.mxu0 %v435
        %496 = vmatprep.subr.mxu0 0.0
        %497 = vmatpush1.msra.mxu0 %v436
        %498 = vmatprep.subr.mxu0 0.0
        %499 = vmatpush1.msra.mxu0 %v437
        %500 = vmatprep.subr.mxu0 0.0
        %501 = vmatpush1.msra.mxu0 %v438
        %502 = vmatprep.subr.mxu0 0.0
        %503 = vmatpush1.msra.mxu0 %v439
        %504 = vmatprep.subr.mxu0 0.0
        %505 = vmatpush1.msra.mxu0 %v440
        %506 = vmatprep.mubr.f32.mxu0 %v408
        %507 = vmatmul.mubr.f32.gmra.mrb[0].mxu0 %v407
        %v508 = vpop.f32.mrb[0].mxu0
        %v509 = vadd.f32 0.0, %v508
        %v510 = vpop.f32.mrb[0].mxu0
        %511 = vdwg.mxu0
        %v512 = vadd.f32 %v441, %v509
        %513 = vst [vmem:[#allocation2] sm:$0xff] %v512
        %p514 = scmp.eq.s32.totalorder %s32, 2
        // Predicated region
        $region73: #{tpu_custom_call.1} parent=51 // pred_check
          %p515 = pneg %p514
        $region74: #{tpu_custom_call.1} parent=51 // pred_check_branch
          %517 = sbr.rel (%p515) target = $region76
        $region75: #{tpu_custom_call.1} parent=51 // pred_region
          %v518 = vld [vmem:[#allocation2] sm:$0xff]
          %v519 = vld [vmem:[%s2] sm:$0x1]
          %v521 = vlaneseq
          %v522 = vshrl.u32 %v521, 7
          %v523 = vsub.s32 0, %v522
          %v524 = vrot.slane %v519, %v523
          %v526 = vadd.f32 %v518, %v524
          %v527 = vmax.f32 %v526, 0.0
          %v528 = vld [vmem:[#allocation8] sm:$0xff]
          %v529 = vld [vmem:[#allocation8 + $0x8] sm:$0xff]
          %v530 = vld [vmem:[#allocation8 + $0x10] sm:$0xff]
          %v531 = vld [vmem:[#allocation8 + $0x18] sm:$0xff]
          %v532 = vld [vmem:[#allocation8 + $0x20] sm:$0xff]
          %v533 = vld [vmem:[#allocation8 + $0x28] sm:$0xff]
          %v534 = vld [vmem:[#allocation8 + $0x30] sm:$0xff]
          %v535 = vld [vmem:[#allocation8 + $0x38] sm:$0xff]
          %v536 = vld [vmem:[#allocation8 + $0x40] sm:$0xff]
          %v537 = vld [vmem:[#allocation8 + $0x48] sm:$0xff]
          %v538 = vld [vmem:[#allocation8 + $0x50] sm:$0xff]
          %v539 = vld [vmem:[#allocation8 + $0x58] sm:$0xff]
          %v540 = vld [vmem:[#allocation8 + $0x60] sm:$0xff]
          %v541 = vld [vmem:[#allocation8 + $0x68] sm:$0xff]
          %v542 = vld [vmem:[#allocation8 + $0x70] sm:$0xff]
          %v543 = vld [vmem:[#allocation8 + $0x78] sm:$0xff]
          %v544 = vld [vmem:[%s4] sm:$0x1]
          %v546 = vlaneseq
          %v547 = vshrl.u32 %v546, 7
          %v548 = vsub.s32 0, %v547
          %v549 = vrot.slane %v544, %v548
          %551 = vmatprep.subr.mxu0 0.0
          %552 = vmatpush1.msra.mxu0 %v528
          %553 = vmatprep.subr.mxu0 0.0
          %554 = vmatpush1.msra.mxu0 %v529
          %555 = vmatprep.subr.mxu0 0.0
          %556 = vmatpush1.msra.mxu0 %v530
          %557 = vmatprep.subr.mxu0 0.0
          %558 = vmatpush1.msra.mxu0 %v531
          %559 = vmatprep.subr.mxu0 0.0
          %560 = vmatpush1.msra.mxu0 %v532
          %561 = vmatprep.subr.mxu0 0.0
          %562 = vmatpush1.msra.mxu0 %v533
          %563 = vmatprep.subr.mxu0 0.0
          %564 = vmatpush1.msra.mxu0 %v534
          %565 = vmatprep.subr.mxu0 0.0
          %566 = vmatpush1.msra.mxu0 %v535
          %567 = vmatprep.subr.mxu0 0.0
          %568 = vmatpush1.msra.mxu0 %v536
          %569 = vmatprep.subr.mxu0 0.0
          %570 = vmatpush1.msra.mxu0 %v537
          %571 = vmatprep.subr.mxu0 0.0
          %572 = vmatpush1.msra.mxu0 %v538
          %573 = vmatprep.subr.mxu0 0.0
          %574 = vmatpush1.msra.mxu0 %v539
          %575 = vmatprep.subr.mxu0 0.0
          %576 = vmatpush1.msra.mxu0 %v540
          %577 = vmatprep.subr.mxu0 0.0
          %578 = vmatpush1.msra.mxu0 %v541
          %579 = vmatprep.subr.mxu0 0.0
          %580 = vmatpush1.msra.mxu0 %v542
          %581 = vmatprep.subr.mxu0 0.0
          %582 = vmatpush1.msra.mxu0 %v543
          %583 = vmatprep.subr.mxu0 0.0
          %584 = vmatpush1.msra.mxu0 0.0
          %585 = vmatprep.subr.mxu0 0.0
          %586 = vmatpush1.msra.mxu0 0.0
          %587 = vmatprep.subr.mxu0 0.0
          %588 = vmatpush1.msra.mxu0 0.0
          %589 = vmatprep.subr.mxu0 0.0
          %590 = vmatpush1.msra.mxu0 0.0
          %591 = vmatprep.subr.mxu0 0.0
          %592 = vmatpush1.msra.mxu0 0.0
          %593 = vmatprep.subr.mxu0 0.0
          %594 = vmatpush1.msra.mxu0 0.0
          %595 = vmatprep.subr.mxu0 0.0
          %596 = vmatpush1.msra.mxu0 0.0
          %597 = vmatprep.subr.mxu0 0.0
          %598 = vmatpush1.msra.mxu0 0.0
          %599 = vmatprep.subr.mxu0 0.0
          %600 = vmatpush1.msra.mxu0 0.0
          %601 = vmatprep.subr.mxu0 0.0
          %602 = vmatpush1.msra.mxu0 0.0
          %603 = vmatprep.subr.mxu0 0.0
          %604 = vmatpush1.msra.mxu0 0.0
          %605 = vmatprep.subr.mxu0 0.0
          %606 = vmatpush1.msra.mxu0 0.0
          %607 = vmatprep.subr.mxu0 0.0
          %608 = vmatpush1.msra.mxu0 0.0
          %609 = vmatprep.subr.mxu0 0.0
          %610 = vmatpush1.msra.mxu0 0.0
          %611 = vmatprep.subr.mxu0 0.0
          %612 = vmatpush1.msra.mxu0 0.0
          %613 = vmatprep.subr.mxu0 0.0
          %614 = vmatpush1.msra.mxu0 0.0
          %615 = vmatprep.mubr.f32.mxu0 0.0
          %616 = vmatmul.mubr.f32.gmra.mrb[0].mxu0 %v527
          %v617 = vpop.f32.mrb[0].mxu0
          %v618 = vadd.f32 %v549, %v617
          %v619 = vpop.f32.mrb[0].mxu0
          %620 = vdwg.mxu0
          %621 = vadd.xlane.f32.xlu0 %v618
          %v622 = vpop.xlane.xlu0 %621
          %v623 = vrcp.pop 128.0
          %v624 = vmul.f32 %v622, %v623
          %v625 = vsub.f32 %v618, %v624
          %v626 = vmul.f32 %v625, %v625
          %627 = vadd.xlane.f32.xlu0 %v626
          %v628 = vpop.xlane.xlu0 %627
          %v629 = vmul.f32 %v628, %v623
          %v630 = vadd.f32 %v629, 1e-05
          %v631 = vrsqrt.pop %v630
          %v632 = vmul.f32 %v625, %v631
          %v633 = vld [vmem:[%s5] sm:$0x1]
          %v635 = vlaneseq
          %v636 = vshrl.u32 %v635, 7
          %v637 = vsub.s32 0, %v636
          %v638 = vrot.slane %v633, %v637
          %v640 = vmul.f32 %v632, %v638
          %v641 = vld [vmem:[%s6] sm:$0x1]
          %v643 = vlaneseq
          %v644 = vshrl.u32 %v643, 7
          %v645 = vsub.s32 0, %v644
          %v646 = vrot.slane %v641, %v645
          %v648 = vadd.f32 %v640, %v646
          %v649 = vmax.f32 %v648, 0.0
          %v650 = vadd.f32 %v527, %v649
          %v651 = vmax.f32 %v650, 0.0
          %s652 = scalar_lea.vmem [#allocation8], 128
          %v653 = vld [vmem:[%s652] sm:$0xff]
          %v654 = vld [vmem:[%s652 + $0x8] sm:$0xff]
          %v655 = vld [vmem:[%s652 + $0x10] sm:$0xff]
          %v656 = vld [vmem:[%s652 + $0x18] sm:$0xff]
          %v657 = vld [vmem:[%s652 + $0x20] sm:$0xff]
          %v658 = vld [vmem:[%s652 + $0x28] sm:$0xff]
          %v659 = vld [vmem:[%s652 + $0x30] sm:$0xff]
          %v660 = vld [vmem:[%s652 + $0x38] sm:$0xff]
          %v661 = vld [vmem:[%s652 + $0x40] sm:$0xff]
          %v662 = vld [vmem:[%s652 + $0x48] sm:$0xff]
          %v663 = vld [vmem:[%s652 + $0x50] sm:$0xff]
          %v664 = vld [vmem:[%s652 + $0x58] sm:$0xff]
          %v665 = vld [vmem:[%s652 + $0x60] sm:$0xff]
          %v666 = vld [vmem:[%s652 + $0x68] sm:$0xff]
          %v667 = vld [vmem:[%s652 + $0x70] sm:$0xff]
          %v668 = vld [vmem:[%s652 + $0x78] sm:$0xff]
          %s669 = scalar_lea.vmem %s4, 1
          %v670 = vld [vmem:[%s669] sm:$0x1]
          %v672 = vlaneseq
          %v673 = vshrl.u32 %v672, 7
          %v674 = vsub.s32 0, %v673
          %v675 = vrot.slane %v670, %v674
          %677 = vmatprep.subr.mxu0 0.0
          %678 = vmatpush1.msra.mxu0 %v653
          %679 = vmatprep.subr.mxu0 0.0
          %680 = vmatpush1.msra.mxu0 %v654
          %681 = vmatprep.subr.mxu0 0.0
          %682 = vmatpush1.msra.mxu0 %v655
          %683 = vmatprep.subr.mxu0 0.0
          %684 = vmatpush1.msra.mxu0 %v656
          %685 = vmatprep.subr.mxu0 0.0
          %686 = vmatpush1.msra.mxu0 %v657
          %687 = vmatprep.subr.mxu0 0.0
          %688 = vmatpush1.msra.mxu0 %v658
          %689 = vmatprep.subr.mxu0 0.0
          %690 = vmatpush1.msra.mxu0 %v659
          %691 = vmatprep.subr.mxu0 0.0
          %692 = vmatpush1.msra.mxu0 %v660
          %693 = vmatprep.subr.mxu0 0.0
          %694 = vmatpush1.msra.mxu0 %v661
          %695 = vmatprep.subr.mxu0 0.0
          %696 = vmatpush1.msra.mxu0 %v662
          %697 = vmatprep.subr.mxu0 0.0
          %698 = vmatpush1.msra.mxu0 %v663
          %699 = vmatprep.subr.mxu0 0.0
          %700 = vmatpush1.msra.mxu0 %v664
          %701 = vmatprep.subr.mxu0 0.0
          %702 = vmatpush1.msra.mxu0 %v665
          %703 = vmatprep.subr.mxu0 0.0
          %704 = vmatpush1.msra.mxu0 %v666
          %705 = vmatprep.subr.mxu0 0.0
          %706 = vmatpush1.msra.mxu0 %v667
          %707 = vmatprep.subr.mxu0 0.0
          %708 = vmatpush1.msra.mxu0 %v668
          %709 = vmatprep.subr.mxu0 0.0
          %710 = vmatpush1.msra.mxu0 0.0
          %711 = vmatprep.subr.mxu0 0.0
          %712 = vmatpush1.msra.mxu0 0.0
          %713 = vmatprep.subr.mxu0 0.0
          %714 = vmatpush1.msra.mxu0 0.0
          %715 = vmatprep.subr.mxu0 0.0
          %716 = vmatpush1.msra.mxu0 0.0
          %717 = vmatprep.subr.mxu0 0.0
          %718 = vmatpush1.msra.mxu0 0.0
          %719 = vmatprep.subr.mxu0 0.0
          %720 = vmatpush1.msra.mxu0 0.0
          %721 = vmatprep.subr.mxu0 0.0
          %722 = vmatpush1.msra.mxu0 0.0
          %723 = vmatprep.subr.mxu0 0.0
          %724 = vmatpush1.msra.mxu0 0.0
          %725 = vmatprep.subr.mxu0 0.0
          %726 = vmatpush1.msra.mxu0 0.0
          %727 = vmatprep.subr.mxu0 0.0
          %728 = vmatpush1.msra.mxu0 0.0
          %729 = vmatprep.subr.mxu0 0.0
          %730 = vmatpush1.msra.mxu0 0.0
          %731 = vmatprep.subr.mxu0 0.0
          %732 = vmatpush1.msra.mxu0 0.0
          %733 = vmatprep.subr.mxu0 0.0
          %734 = vmatpush1.msra.mxu0 0.0
          %735 = vmatprep.subr.mxu0 0.0
          %736 = vmatpush1.msra.mxu0 0.0
          %737 = vmatprep.subr.mxu0 0.0
          %738 = vmatpush1.msra.mxu0 0.0
          %739 = vmatprep.subr.mxu0 0.0
          %740 = vmatpush1.msra.mxu0 0.0
          %741 = vmatprep.mubr.f32.mxu0 0.0
          %742 = vmatmul.mubr.f32.gmra.mrb[0].mxu0 %v651
          %v743 = vpop.f32.mrb[0].mxu0
          %v744 = vadd.f32 %v675, %v743
          %v745 = vpop.f32.mrb[0].mxu0
          %746 = vdwg.mxu0
          %747 = vadd.xlane.f32.xlu0 %v744
          %v748 = vpop.xlane.xlu0 %747
          %v749 = vmul.f32 %v748, %v623
          %v750 = vsub.f32 %v744, %v749
          %v751 = vmul.f32 %v750, %v750
          %752 = vadd.xlane.f32.xlu0 %v751
          %v753 = vpop.xlane.xlu0 %752
          %v754 = vmul.f32 %v753, %v623
          %v755 = vadd.f32 %v754, 1e-05
          %v756 = vrsqrt.pop %v755
          %v757 = vmul.f32 %v750, %v756
          %s758 = scalar_lea.vmem %s5, 1
          %v759 = vld [vmem:[%s758] sm:$0x1]
          %v761 = vlaneseq
          %v762 = vshrl.u32 %v761, 7
          %v763 = vsub.s32 0, %v762
          %v764 = vrot.slane %v759, %v763
          %v766 = vmul.f32 %v757, %v764
          %s767 = scalar_lea.vmem %s6, 1
          %v768 = vld [vmem:[%s767] sm:$0x1]
          %v770 = vlaneseq
          %v771 = vshrl.u32 %v770, 7
          %v772 = vsub.s32 0, %v771
          %v773 = vrot.slane %v768, %v772
          %v775 = vadd.f32 %v766, %v773
          %v776 = vmax.f32 %v775, 0.0
          %v777 = vadd.f32 %v651, %v776
          %v778 = vmax.f32 %v777, 0.0
          %s779 = scalar_lea.vmem [#allocation8], 256
          %v780 = vld [vmem:[%s779] sm:$0xff]
          %v781 = vld [vmem:[%s779 + $0x8] sm:$0xff]
          %v782 = vld [vmem:[%s779 + $0x10] sm:$0xff]
          %v783 = vld [vmem:[%s779 + $0x18] sm:$0xff]
          %v784 = vld [vmem:[%s779 + $0x20] sm:$0xff]
          %v785 = vld [vmem:[%s779 + $0x28] sm:$0xff]
          %v786 = vld [vmem:[%s779 + $0x30] sm:$0xff]
          %v787 = vld [vmem:[%s779 + $0x38] sm:$0xff]
          %v788 = vld [vmem:[%s779 + $0x40] sm:$0xff]
          %v789 = vld [vmem:[%s779 + $0x48] sm:$0xff]
          %v790 = vld [vmem:[%s779 + $0x50] sm:$0xff]
          %v791 = vld [vmem:[%s779 + $0x58] sm:$0xff]
          %v792 = vld [vmem:[%s779 + $0x60] sm:$0xff]
          %v793 = vld [vmem:[%s779 + $0x68] sm:$0xff]
          %v794 = vld [vmem:[%s779 + $0x70] sm:$0xff]
          %v795 = vld [vmem:[%s779 + $0x78] sm:$0xff]
          %s796 = scalar_lea.vmem %s4, 2
          %v797 = vld [vmem:[%s796] sm:$0x1]
          %v799 = vlaneseq
          %v800 = vshrl.u32 %v799, 7
          %v801 = vsub.s32 0, %v800
          %v802 = vrot.slane %v797, %v801
          %804 = vmatprep.subr.mxu0 0.0
          %805 = vmatpush1.msra.mxu0 %v780
          %806 = vmatprep.subr.mxu0 0.0
          %807 = vmatpush1.msra.mxu0 %v781
          %808 = vmatprep.subr.mxu0 0.0
          %809 = vmatpush1.msra.mxu0 %v782
          %810 = vmatprep.subr.mxu0 0.0
          %811 = vmatpush1.msra.mxu0 %v783
          %812 = vmatprep.subr.mxu0 0.0
          %813 = vmatpush1.msra.mxu0 %v784
          %814 = vmatprep.subr.mxu0 0.0
          %815 = vmatpush1.msra.mxu0 %v785
          %816 = vmatprep.subr.mxu0 0.0
          %817 = vmatpush1.msra.mxu0 %v786
          %818 = vmatprep.subr.mxu0 0.0
          %819 = vmatpush1.msra.mxu0 %v787
          %820 = vmatprep.subr.mxu0 0.0
          %821 = vmatpush1.msra.mxu0 %v788
          %822 = vmatprep.subr.mxu0 0.0
          %823 = vmatpush1.msra.mxu0 %v789
          %824 = vmatprep.subr.mxu0 0.0
          %825 = vmatpush1.msra.mxu0 %v790
          %826 = vmatprep.subr.mxu0 0.0
          %827 = vmatpush1.msra.mxu0 %v791
          %828 = vmatprep.subr.mxu0 0.0
          %829 = vmatpush1.msra.mxu0 %v792
          %830 = vmatprep.subr.mxu0 0.0
          %831 = vmatpush1.msra.mxu0 %v793
          %832 = vmatprep.subr.mxu0 0.0
          %833 = vmatpush1.msra.mxu0 %v794
          %834 = vmatprep.subr.mxu0 0.0
          %835 = vmatpush1.msra.mxu0 %v795
          %836 = vmatprep.subr.mxu0 0.0
          %837 = vmatpush1.msra.mxu0 0.0
          %838 = vmatprep.subr.mxu0 0.0
          %839 = vmatpush1.msra.mxu0 0.0
          %840 = vmatprep.subr.mxu0 0.0
          %841 = vmatpush1.msra.mxu0 0.0
          %842 = vmatprep.subr.mxu0 0.0
          %843 = vmatpush1.msra.mxu0 0.0
          %844 = vmatprep.subr.mxu0 0.0
          %845 = vmatpush1.msra.mxu0 0.0
          %846 = vmatprep.subr.mxu0 0.0
          %847 = vmatpush1.msra.mxu0 0.0
          %848 = vmatprep.subr.mxu0 0.0
          %849 = vmatpush1.msra.mxu0 0.0
          %850 = vmatprep.subr.mxu0 0.0
          %851 = vmatpush1.msra.mxu0 0.0
          %852 = vmatprep.subr.mxu0 0.0
          %853 = vmatpush1.msra.mxu0 0.0
          %854 = vmatprep.subr.mxu0 0.0
          %855 = vmatpush1.msra.mxu0 0.0
          %856 = vmatprep.subr.mxu0 0.0
          %857 = vmatpush1.msra.mxu0 0.0
          %858 = vmatprep.subr.mxu0 0.0
          %859 = vmatpush1.msra.mxu0 0.0
          %860 = vmatprep.subr.mxu0 0.0
          %861 = vmatpush1.msra.mxu0 0.0
          %862 = vmatprep.subr.mxu0 0.0
          %863 = vmatpush1.msra.mxu0 0.0
          %864 = vmatprep.subr.mxu0 0.0
          %865 = vmatpush1.msra.mxu0 0.0
          %866 = vmatprep.subr.mxu0 0.0
          %867 = vmatpush1.msra.mxu0 0.0
          %868 = vmatprep.mubr.f32.mxu0 0.0
          %869 = vmatmul.mubr.f32.gmra.mrb[0].mxu0 %v778
          %v870 = vpop.f32.mrb[0].mxu0
          %v871 = vadd.f32 %v802, %v870
          %v872 = vpop.f32.mrb[0].mxu0
          %873 = vdwg.mxu0
          %874 = vadd.xlane.f32.xlu0 %v871
          %v875 = vpop.xlane.xlu0 %874
          %v876 = vmul.f32 %v875, %v623
          %v877 = vsub.f32 %v871, %v876
          %v878 = vmul.f32 %v877, %v877
          %879 = vadd.xlane.f32.xlu0 %v878
          %v880 = vpop.xlane.xlu0 %879
          %v881 = vmul.f32 %v880, %v623
          %v882 = vadd.f32 %v881, 1e-05
          %v883 = vrsqrt.pop %v882
          %v884 = vmul.f32 %v877, %v883
          %s885 = scalar_lea.vmem %s5, 2
          %v886 = vld [vmem:[%s885] sm:$0x1]
          %v888 = vlaneseq
          %v889 = vshrl.u32 %v888, 7
          %v890 = vsub.s32 0, %v889
          %v891 = vrot.slane %v886, %v890
          %v893 = vmul.f32 %v884, %v891
          %s894 = scalar_lea.vmem %s6, 2
          %v895 = vld [vmem:[%s894] sm:$0x1]
          %v897 = vlaneseq
          %v898 = vshrl.u32 %v897, 7
          %v899 = vsub.s32 0, %v898
          %v900 = vrot.slane %v895, %v899
          %v902 = vadd.f32 %v893, %v900
          %v903 = vmax.f32 %v902, 0.0
          %v904 = vadd.f32 %v778, %v903
          %v905 = vmax.f32 %v904, 0.0
          %v906 = vld [vmem:[#allocation9] sm:$0xff]
          %v907 = vld [vmem:[#allocation9 + $0x8] sm:$0xff]
          %v908 = vld [vmem:[#allocation9 + $0x10] sm:$0xff]
          %v909 = vld [vmem:[#allocation9 + $0x18] sm:$0xff]
          %v910 = vld [vmem:[#allocation9 + $0x20] sm:$0xff]
          %v911 = vld [vmem:[#allocation9 + $0x28] sm:$0xff]
          %v912 = vld [vmem:[#allocation9 + $0x30] sm:$0xff]
          %v913 = vld [vmem:[#allocation9 + $0x38] sm:$0xff]
          %v914 = vld [vmem:[#allocation9 + $0x40] sm:$0xff]
          %v915 = vld [vmem:[#allocation9 + $0x48] sm:$0xff]
          %v916 = vld [vmem:[#allocation9 + $0x50] sm:$0xff]
          %v917 = vld [vmem:[#allocation9 + $0x58] sm:$0xff]
          %v918 = vld [vmem:[#allocation9 + $0x60] sm:$0xff]
          %v919 = vld [vmem:[#allocation9 + $0x68] sm:$0xff]
          %v920 = vld [vmem:[#allocation9 + $0x70] sm:$0xff]
          %v921 = vld [vmem:[#allocation9 + $0x78] sm:$0xff]
          %922 = vmatprep.subr.mxu0 0.0
          %923 = vmatpush1.msra.mxu0 %v906
          %924 = vmatprep.subr.mxu0 0.0
          %925 = vmatpush1.msra.mxu0 %v907
          %926 = vmatprep.subr.mxu0 0.0
          %927 = vmatpush1.msra.mxu0 %v908
          %928 = vmatprep.subr.mxu0 0.0
          %929 = vmatpush1.msra.mxu0 %v909
          %930 = vmatprep.subr.mxu0 0.0
          %931 = vmatpush1.msra.mxu0 %v910
          %932 = vmatprep.subr.mxu0 0.0
          %933 = vmatpush1.msra.mxu0 %v911
          %934 = vmatprep.subr.mxu0 0.0
          %935 = vmatpush1.msra.mxu0 %v912
          %936 = vmatprep.subr.mxu0 0.0
          %937 = vmatpush1.msra.mxu0 %v913
          %938 = vmatprep.subr.mxu0 0.0
          %939 = vmatpush1.msra.mxu0 %v914
          %940 = vmatprep.subr.mxu0 0.0
          %941 = vmatpush1.msra.mxu0 %v915
          %942 = vmatprep.subr.mxu0 0.0
          %943 = vmatpush1.msra.mxu0 %v916
          %944 = vmatprep.subr.mxu0 0.0
          %945 = vmatpush1.msra.mxu0 %v917
          %946 = vmatprep.subr.mxu0 0.0
          %947 = vmatpush1.msra.mxu0 %v918
          %948 = vmatprep.subr.mxu0 0.0
          %949 = vmatpush1.msra.mxu0 %v919
          %950 = vmatprep.subr.mxu0 0.0
          %951 = vmatpush1.msra.mxu0 %v920
          %952 = vmatprep.subr.mxu0 0.0
          %953 = vmatpush1.msra.mxu0 %v921
          %954 = vmatprep.subr.mxu0 0.0
          %955 = vmatpush1.msra.mxu0 0.0
          %956 = vmatprep.subr.mxu0 0.0
          %957 = vmatpush1.msra.mxu0 0.0
          %958 = vmatprep.subr.mxu0 0.0
          %959 = vmatpush1.msra.mxu0 0.0
          %960 = vmatprep.subr.mxu0 0.0
          %961 = vmatpush1.msra.mxu0 0.0
          %962 = vmatprep.subr.mxu0 0.0
          %963 = vmatpush1.msra.mxu0 0.0
          %964 = vmatprep.subr.mxu0 0.0
          %965 = vmatpush1.msra.mxu0 0.0
          %966 = vmatprep.subr.mxu0 0.0
          %967 = vmatpush1.msra.mxu0 0.0
          %968 = vmatprep.subr.mxu0 0.0
          %969 = vmatpush1.msra.mxu0 0.0
          %970 = vmatprep.subr.mxu0 0.0
          %971 = vmatpush1.msra.mxu0 0.0
          %972 = vmatprep.subr.mxu0 0.0
          %973 = vmatpush1.msra.mxu0 0.0
          %974 = vmatprep.subr.mxu0 0.0
          %975 = vmatpush1.msra.mxu0 0.0
          %976 = vmatprep.subr.mxu0 0.0
          %977 = vmatpush1.msra.mxu0 0.0
          %978 = vmatprep.subr.mxu0 0.0
          %979 = vmatpush1.msra.mxu0 0.0
          %980 = vmatprep.subr.mxu0 0.0
          %981 = vmatpush1.msra.mxu0 0.0
          %982 = vmatprep.subr.mxu0 0.0
          %983 = vmatpush1.msra.mxu0 0.0
          %984 = vmatprep.subr.mxu0 0.0
          %985 = vmatpush1.msra.mxu0 0.0
          %986 = vmatprep.mubr.f32.mxu0 0.0
          %987 = vmatmul.mubr.f32.gmra.mrb[0].mxu0 %v905
          %v988 = vpop.f32.mrb[0].mxu0
          %v989 = vadd.f32 0.0, %v988
          %v990 = vpop.f32.mrb[0].mxu0
          %991 = vdwg.mxu0
          %992 = vst [vmem:[#allocation11] sm:$0xff] %v989
        $region76: #{tpu_custom_call.1} parent=51 // pred_fallthru
          _
        // Predicated region
        $region77: #{tpu_custom_call.1} parent=51 // pred_check
          %p993 = pneg %p237
        $region78: #{tpu_custom_call.1} parent=51 // pred_check_branch
          %995 = sbr.rel (%p993) target = $region80
        $region79: #{tpu_custom_call.1} parent=51 // pred_region
          %s997 = ssub.s32 128, 128
          %998 = vsyncadd [#allocation5], %s997
          %s999 = smul.addr %s31, 128
          %s1000 = scalar_lea.hbm %s8, %s999
          %s1002 = sshll.u32 [#allocation11], 4
          %s1003 = int_to_ptr.vmem [resolvable:$true] %s1002
          %1005 = dma.vmem_to_hbm [thread:$0]  %s1003, 128, %s1000, [#allocation5]
        $region80: #{tpu_custom_call.1} parent=51 // pred_fallthru
          _
        // Predicated region
        $region81: #{tpu_custom_call.1} parent=51 // pred_check
          %p1006 = pneg %p237
        $region82: #{tpu_custom_call.1} parent=51 // pred_check_branch
          %1008 = sbr.rel (%p1006) target = $region84
        $region83: #{tpu_custom_call.1} parent=51 // pred_region
          %1009 = dma.done [#allocation5], 128
        $region84: #{tpu_custom_call.1} parent=51 // pred_fallthru
          _
      $region52: #{tpu_custom_call.1} parent=5 // pred_fallthru
        _
      %p1010 = scmp.le.s32.totalorder 2, %s22
      // Predicated region
      $region85: #{tpu_custom_call.1} parent=5 // pred_check
        %p1011 = pneg %p1010
      $region86: #{tpu_custom_call.1} parent=5 // pred_check_branch
        %1013 = sbr.rel (%p1011) target = $region88
      $region87: #{tpu_custom_call.1} parent=5 // pred_region
        %s1014 = ssub.s32 %s22, 2
      $region88: #{tpu_custom_call.1} parent=5 // pred_fallthru
        _
    $region6: #{tpu_custom_call.1} parent=1 // loop_footer
      %s26 = sadd.s32 1, %s22
    $region7: #{tpu_custom_call.1} parent=1 // loop_footer_branch
      %21 = sbr.rel target = $region3
    $region8: #{tpu_custom_call.1} parent=1 // loop_exit
      _
    %1015 = vsyncpa [#allocation4], 1
    %s1016 = scalar_lea.sflag [#allocation4], 1
    %1017 = vsyncpa %s1016, 1
    %1018 = vsyncpa [#allocation7], 1
    %s1019 = scalar_lea.sflag [#allocation7], 1
    %1020 = vsyncpa %s1019, 1
    %1021 = vsyncpa [#allocation10], 1
    %1022 = vsyncpa [#allocation5], 1
    %s1023 = scalar_lea.sflag [#allocation5], 1
    %1024 = vsyncpa %s1023, 1

</llo_original>
